<compile_context>
chip_gen: v6e
topology: v6e:2x2x1
jax: 0.10.0
libtpu: 0.0.40
codegen_flags: <defaults>
</compile_context>

<pallas_src>
import functools

import jax
import jax.numpy as jnp
from jax.experimental import pallas as pl
from jax.experimental.pallas import tpu as pltpu

HID_N = 64
FEAT_CH = 16 + 3                       # 19
N_VIEWS = 3
VOX_CH = 8
IN_CH = VOX_CH + FEAT_CH * N_VIEWS     # 8 + 57 = 65
OUT_CH = 4                             # [color(3), sigma(1)]


def _round_up(x, m):
    return -(-x // m) * m


def _mvsnerf_kernel(xT_ref, w0T_ref, whT_ref, wc2T_ref,
                    b0_ref, bh_ref, bc2_ref, o_ref):
    """Fused MLP for one lane-tile of points (feature-major layout).

    xT_ref  : (65, TM)     x^T = [vox | img_feat]^T, compute dtype
    w0T_ref : (64, 65)     lr0 weight, transposed
    whT_ref : (65, 64)     [Wc1^T ; Ws^T] fused heads weight
    wc2T_ref: (3, 64)      color layer-2 weight, transposed
    b0_ref  : (64, 1) f32  lr0 bias (column, broadcast along lanes)
    bh_ref  : (65, 1) f32  [bc1 ; bs] bias column
    bc2_ref : (3, 1)  f32  color layer-2 bias column
    o_ref   : (4, TM) f32  out^T = [sigmoid(color); softplus(sigma)]
    """
    cd = w0T_ref.dtype                      # MXU operand dtype
    hid_n = w0T_ref.shape[0]

    # lr0: Linear(65 -> 64) + ReLU, transposed: h^T = relu(W0^T @ x^T + b0)
    hT = (jnp.dot(w0T_ref[...], xT_ref[...], preferred_element_type=jnp.float32)
          + b0_ref[...])
    hT = jnp.maximum(hT, 0.0)

    # (self.lrs is an empty ModuleList -> no hidden layers)

    # Fused heads: [Wc1^T ; Ws^T] @ h^T -> (65, TM)
    #   rows 0:64 = color layer-1 pre-act, row 64 = sigma pre-act.
    hcT = (jnp.dot(whT_ref[...], hT.astype(cd), preferred_element_type=jnp.float32)
           + bh_ref[...])

    # sigma head: Softplus (PyTorch default threshold = 20) — lane-dense (1, TM)
    s_pre = hcT[hid_n:hid_n + 1, :]
    sigma = jnp.where(s_pre > 20.0, s_pre,
                      jnp.log1p(jnp.exp(jnp.minimum(s_pre, 20.0))))

    # color head: ReLU + Linear(64 -> 3) + Sigmoid — lane-dense (3, TM)
    cT = jnp.maximum(hcT[:hid_n, :], 0.0)
    col_pre = (jnp.dot(wc2T_ref[...], cT.astype(cd), preferred_element_type=jnp.float32)
               + bc2_ref[...])
    color = jax.nn.sigmoid(col_pre)

    # out^T = cat([color, sigma], axis=0): single full-tile, lane-dense store.
    o_ref[...] = jnp.concatenate([color, sigma], axis=0).astype(o_ref.dtype)


def init_params(key, hid_n=HID_N, in_ch=IN_CH):
    """Deterministic kaiming-normal weights (fan_in), zero biases — mirrors weights_init."""
    def kaiming(k, fan_in, fan_out):
        std = jnp.sqrt(2.0 / fan_in)
        return jax.random.normal(k, (fan_in, fan_out), jnp.float32) * std

    k0, k1, k2, k3 = jax.random.split(key, 4)
    return {
        "w0":  kaiming(k0, in_ch, hid_n),  "b0":  jnp.zeros((1, hid_n), jnp.float32),
        "ws":  kaiming(k1, hid_n, 1),      "bs":  jnp.zeros((1, 1), jnp.float32),
        "wc1": kaiming(k2, hid_n, hid_n),  "bc1": jnp.zeros((1, hid_n), jnp.float32),
        "wc2": kaiming(k3, hid_n, 3),      "bc2": jnp.zeros((1, 3), jnp.float32),
    }


def pack_params(params, compute_dtype=jnp.bfloat16):
    """Pack parameters for the feature-major kernel.  Call ONCE per parameter
    set (outside the per-call path); the forward consumes the packed dict.

    * Weights pre-transposed (feature-major LHS) and cast to the compute dtype.
    * sigma and color layer-1 fused into one (65, 64) weight.
    * Biases kept as f32 column vectors (broadcast along lanes in-kernel).
    """
    cd = compute_dtype
    w0T = params["w0"].T.astype(cd)                                     # (64, 65)
    whT = jnp.concatenate([params["wc1"].T, params["ws"].T], axis=0).astype(cd)  # (65, 64)
    wc2T = params["wc2"].T.astype(cd)                                   # (3, 64)

    b0c = params["b0"].reshape(-1, 1).astype(jnp.float32)               # (64, 1)
    bhc = jnp.concatenate([params["bc1"].reshape(-1),
                           params["bs"].reshape(-1)]).reshape(-1, 1).astype(jnp.float32)  # (65, 1)
    bc2c = params["bc2"].reshape(-1, 1).astype(jnp.float32)             # (3, 1)
    return dict(w0T=w0T, whT=whT, wc2T=wc2T, b0c=b0c, bhc=bhc, bc2c=bc2c)


@functools.partial(jax.jit, static_argnames=("tm",))
def mvsnerf_forward(vox_feat, img_feat_rgb_dir, packed, *, tm=4096):
    """vox_feat: (B, N_points, 8); img_feat_rgb_dir: (B, N_points, N_views, feat_ch+4).

    `packed` is the output of pack_params (its dtype selects the MXU operand dtype).
    Returns (B, N_points, 4) = cat([sigmoid(color), softplus(sigma)], -1), float32.
    """
    B, Np, Nv, C = img_feat_rgb_dir.shape
    M = B * Np
    feat_ch = C - 4
    cd = packed["w0T"].dtype
    hid_n = packed["w0T"].shape[0]

    # Build the feature-major input slab x^T (in_ch, M): drop dir columns per view,
    # concat with vox features, transpose.  One fused XLA copy; cast to compute dtype.
    img_feat = img_feat_rgb_dir[..., :feat_ch].reshape(B, Np, Nv * feat_ch)
    x = jnp.concatenate([vox_feat, img_feat], axis=-1).reshape(M, -1)
    xT = x.T.astype(cd)                                  # (in_ch, M)
    in_ch = xT.shape[0]

    # Point tile on the lane axis: multiple of 128, clamped for small inputs.
    tm_eff = max(128, min(tm, _round_up(M, 128)))
    if M > 128:
        # Prefer >= 2 grid steps so the 'parallel' axis can shard across TensorCores.
        tm_eff = min(tm_eff, _round_up(-(-M // 2), 128))
    tm_eff = _round_up(tm_eff, 128)
    Mp = _round_up(M, tm_eff)
    if Mp != M:
        xT = jnp.pad(xT, ((0, 0), (0, Mp - M)))

    const_spec = lambda shape: pl.BlockSpec(shape, lambda i: (0, 0))

    out = pl.pallas_call(
        _mvsnerf_kernel,
        out_shape=jax.ShapeDtypeStruct((OUT_CH, Mp), jnp.float32),
        grid_spec=pl.GridSpec(
            grid=(Mp // tm_eff,),
            in_specs=[
                pl.BlockSpec((in_ch, tm_eff), lambda i: (0, i)),   # x^T, lane-tiled points
                const_spec((hid_n, in_ch)),                        # W0^T
                const_spec((hid_n + 1, hid_n)),                    # [Wc1^T ; Ws^T]
                const_spec((packed["wc2T"].shape[0], hid_n)),      # Wc2^T
                const_spec((hid_n, 1)),                            # b0 column
                const_spec((hid_n + 1, 1)),                        # [bc1 ; bs] column
                const_spec((packed["wc2T"].shape[0], 1)),          # bc2 column
            ],
            out_specs=pl.BlockSpec((OUT_CH, tm_eff), lambda i: (0, i)),
        ),
        compiler_params=pltpu.CompilerParams(
            dimension_semantics=("parallel",)),
    )(xT, packed["w0T"], packed["whT"], packed["wc2T"],
      packed["b0c"], packed["bhc"], packed["bc2c"])

    # Slice padded points on the lane axis BEFORE transposing back to row-major.
    return out[:, :M].T.reshape(B, Np, OUT_CH)


def _reference_forward(vox_feat, img_feat_rgb_dir, params, compute_dtype=jnp.float32):
    """Plain-JAX reference mirroring the PyTorch forward (optionally bf16 operands)."""
    B, Np, Nv, C = img_feat_rgb_dir.shape
    img_feat = img_feat_rgb_dir[..., :-4].reshape(B, Np, Nv * (C - 4))
    x = jnp.concatenate([vox_feat, img_feat], axis=-1)

    cd = compute_dtype
    def mm(a, w):
        return jnp.dot(a.astype(cd), w.astype(cd), preferred_element_type=jnp.float32)

    h = jax.nn.relu(mm(x, params["w0"]) + params["b0"])
    s_pre = mm(h, params["ws"]) + params["bs"]
    sigma = jnp.where(s_pre > 20.0, s_pre, jnp.log1p(jnp.exp(jnp.minimum(s_pre, 20.0))))
    c = jax.nn.relu(mm(h, params["wc1"]) + params["bc1"])
    color = jax.nn.sigmoid(mm(c, params["wc2"]) + params["bc2"])
    return jnp.concatenate([color, sigma], axis=-1)


if __name__ == "__main__":
    key = jax.random.PRNGKey(0)
    k_p, k_v, k_i = jax.random.split(key, 3)

    B, Np = 2, 201                      # ragged row count: exercises tile clamp + pad
    params = init_params(k_p)

    vox_feat = jax.random.normal(k_v, (B, Np, VOX_CH), jnp.float32)
    img_feat_rgb_dir = jax.random.normal(k_i, (B, Np, N_VIEWS, FEAT_CH + 4), jnp.float32)

    # 1) Exact-semantics check: f32 compute path vs f32 reference.
    packed_f32 = pack_params(params, compute_dtype=jnp.float32)
    out32 = jax.block_until_ready(mvsnerf_forward(vox_feat, img_feat_rgb_dir, packed_f32))
    ref32 = _reference_forward(vox_feat, img_feat_rgb_dir, params, jnp.float32)
    assert out32.shape == (B, Np, OUT_CH)
    assert jnp.allclose(out32, ref32, atol=1e-4, rtol=1e-4), "f32 mismatch vs reference"

    # 2) Fast default path: bf16 MXU operands, f32 accumulation / epilogue.
    packed_bf16 = pack_params(params, compute_dtype=jnp.bfloat16)
    out_bf16 = jax.block_until_ready(mvsnerf_forward(vox_feat, img_feat_rgb_dir, packed_bf16))
    ref_bf16 = _reference_forward(vox_feat, img_feat_rgb_dir, params, jnp.bfloat16)
    assert out_bf16.shape == (B, Np, OUT_CH)
    assert jnp.allclose(out_bf16, ref_bf16, atol=5e-3, rtol=5e-3), \
        "bf16 mismatch vs matched-precision reference"

    # TODO(synk): optional fp8 layer-0 operands on v7x (post bundle-dump validation).
    print("KERNEL_OK")
</pallas_src>

<mosaic_0001>
module attributes {stable_mosaic.version = 11 : i64} {
  func.func @_mvsnerf_kernel(%arg0: i32, %arg1: memref<65x256xf32, #tpu.memory_space<vmem>>, %arg2: memref<64x65xf32, #tpu.memory_space<vmem>>, %arg3: memref<65x64xf32, #tpu.memory_space<vmem>>, %arg4: memref<3x64xf32, #tpu.memory_space<vmem>>, %arg5: memref<64x1xf32, #tpu.memory_space<vmem>>, %arg6: memref<65x1xf32, #tpu.memory_space<vmem>>, %arg7: memref<3x1xf32, #tpu.memory_space<vmem>>, %arg8: memref<4x256xf32, #tpu.memory_space<vmem>>) attributes {dimension_semantics = [#tpu.dimension_semantics<parallel>], iteration_bounds = array<i64: 2>, scalar_prefetch = 0 : i64, scratch_operands = 0 : i64, tpu.core_type = #tpu.core_type<tc>, window_params = [{transform_indices = @transform_0, window_bounds = array<i64: 65, 256>}, {pipeline_mode = #tpu.pipeline_mode<synchronous>, transform_indices = @transform_1, window_bounds = array<i64: 64, 65>}, {pipeline_mode = #tpu.pipeline_mode<synchronous>, transform_indices = @transform_2, window_bounds = array<i64: 65, 64>}, {pipeline_mode = #tpu.pipeline_mode<synchronous>, transform_indices = @transform_3, window_bounds = array<i64: 3, 64>}, {pipeline_mode = #tpu.pipeline_mode<synchronous>, transform_indices = @transform_4, window_bounds = array<i64: 64, 1>}, {pipeline_mode = #tpu.pipeline_mode<synchronous>, transform_indices = @transform_5, window_bounds = array<i64: 65, 1>}, {pipeline_mode = #tpu.pipeline_mode<synchronous>, transform_indices = @transform_6, window_bounds = array<i64: 3, 1>}, {transform_indices = @transform_7, window_bounds = array<i64: 4, 256>}]} {
    %c0 = arith.constant 0 : index
    %c0_0 = arith.constant 0 : index
    %0 = vector.load %arg2[%c0, %c0_0] : memref<64x65xf32, #tpu.memory_space<vmem>>, vector<64x65xf32>
    %c0_1 = arith.constant 0 : index
    %c0_2 = arith.constant 0 : index
    %1 = vector.load %arg1[%c0_1, %c0_2] : memref<65x256xf32, #tpu.memory_space<vmem>>, vector<65x256xf32>
    %cst = arith.constant dense<0.000000e+00> : vector<64x256xf32>
    %2 = tpu.matmul %0, %1, %cst {dimension_numbers = #tpu.dot_dimension_numbers<[1], [0], [0], [1], [0, 0, 1, 1], [], []>} : vector<64x65xf32>, vector<65x256xf32>, vector<64x256xf32> -> vector<64x256xf32>
    %c0_3 = arith.constant 0 : index
    %c0_4 = arith.constant 0 : index
    %3 = vector.load %arg5[%c0_3, %c0_4] : memref<64x1xf32, #tpu.memory_space<vmem>>, vector<64x1xf32>
    %4 = vector.broadcast %3 : vector<64x1xf32> to vector<64x256xf32>
    %5 = arith.addf %2, %4 : vector<64x256xf32>
    %cst_5 = arith.constant 0.000000e+00 : f32
    %6 = vector.broadcast %cst_5 : f32 to vector<64x256xf32>
    %7 = arith.maximumf %5, %6 : vector<64x256xf32>
    %c0_6 = arith.constant 0 : index
    %c0_7 = arith.constant 0 : index
    %8 = vector.load %arg3[%c0_6, %c0_7] : memref<65x64xf32, #tpu.memory_space<vmem>>, vector<65x64xf32>
    %cst_8 = arith.constant dense<0.000000e+00> : vector<65x256xf32>
    %9 = tpu.matmul %8, %7, %cst_8 {dimension_numbers = #tpu.dot_dimension_numbers<[1], [0], [0], [1], [0, 0, 1, 1], [], []>} : vector<65x64xf32>, vector<64x256xf32>, vector<65x256xf32> -> vector<65x256xf32>
    %c0_9 = arith.constant 0 : index
    %c0_10 = arith.constant 0 : index
    %10 = vector.load %arg6[%c0_9, %c0_10] : memref<65x1xf32, #tpu.memory_space<vmem>>, vector<65x1xf32>
    %11 = vector.broadcast %10 : vector<65x1xf32> to vector<65x256xf32>
    %12 = arith.addf %9, %11 : vector<65x256xf32>
    %13 = vector.extract_strided_slice %12 {offsets = [64, 0], sizes = [1, 256], strides = [1, 1]} : vector<65x256xf32> to vector<1x256xf32>
    %cst_11 = arith.constant 2.000000e+01 : f32
    %14 = vector.broadcast %cst_11 : f32 to vector<1x256xf32>
    %15 = arith.cmpf ogt, %13, %14 : vector<1x256xf32>
    %cst_12 = arith.constant 2.000000e+01 : f32
    %16 = vector.broadcast %cst_12 : f32 to vector<1x256xf32>
    %17 = arith.minimumf %13, %16 : vector<1x256xf32>
    %18 = math.exp %17 : vector<1x256xf32>
    %19 = math.log1p %18 : vector<1x256xf32>
    %20 = arith.select %15, %13, %19 : vector<1x256xi1>, vector<1x256xf32>
    %21 = vector.extract_strided_slice %12 {offsets = [0, 0], sizes = [64, 256], strides = [1, 1]} : vector<65x256xf32> to vector<64x256xf32>
    %cst_13 = arith.constant 0.000000e+00 : f32
    %22 = vector.broadcast %cst_13 : f32 to vector<64x256xf32>
    %23 = arith.maximumf %21, %22 : vector<64x256xf32>
    %c0_14 = arith.constant 0 : index
    %c0_15 = arith.constant 0 : index
    %24 = vector.load %arg4[%c0_14, %c0_15] : memref<3x64xf32, #tpu.memory_space<vmem>>, vector<3x64xf32>
    %cst_16 = arith.constant dense<0.000000e+00> : vector<3x256xf32>
    %25 = tpu.matmul %24, %23, %cst_16 {dimension_numbers = #tpu.dot_dimension_numbers<[1], [0], [0], [1], [0, 0, 1, 1], [], []>} : vector<3x64xf32>, vector<64x256xf32>, vector<3x256xf32> -> vector<3x256xf32>
    %c0_17 = arith.constant 0 : index
    %c0_18 = arith.constant 0 : index
    %26 = vector.load %arg7[%c0_17, %c0_18] : memref<3x1xf32, #tpu.memory_space<vmem>>, vector<3x1xf32>
    %27 = vector.broadcast %26 : vector<3x1xf32> to vector<3x256xf32>
    %28 = arith.addf %25, %27 : vector<3x256xf32>
    %29 = arith.negf %28 : vector<3x256xf32>
    %30 = math.exp %29 : vector<3x256xf32>
    %cst_19 = arith.constant 1.000000e+00 : f32
    %31 = vector.broadcast %cst_19 : f32 to vector<3x256xf32>
    %32 = arith.addf %31, %30 : vector<3x256xf32>
    %33 = arith.divf %31, %32 : vector<3x256xf32>
    %34 = tpu.concatenate %33, %20 in 0 : vector<3x256xf32>, vector<1x256xf32> -> vector<4x256xf32>
    %c0_20 = arith.constant 0 : index
    %c0_21 = arith.constant 0 : index
    %35 = vector.load %arg8[%c0_20, %c0_21] : memref<4x256xf32, #tpu.memory_space<vmem>>, vector<4x256xf32>
    tpu.vector_store %arg8[%c0_20, %c0_21], %34 {strides = array<i32>} : memref<4x256xf32, #tpu.memory_space<vmem>>, vector<4x256xf32>,
    return
  }
  func.func @transform_0(%arg0: i32) -> (i32, i32) {
    %c0_i32 = arith.constant 0 : i32
    %c0_i32_0 = arith.constant 0 : i32
    return %c0_i32, %arg0 : i32, i32
  }
  func.func @transform_1(%arg0: i32) -> (i32, i32) {
    %c0_i32 = arith.constant 0 : i32
    %c0_i32_0 = arith.constant 0 : i32
    %c0_i32_1 = arith.constant 0 : i32
    return %c0_i32, %c0_i32_0 : i32, i32
  }
  func.func @transform_2(%arg0: i32) -> (i32, i32) {
    %c0_i32 = arith.constant 0 : i32
    %c0_i32_0 = arith.constant 0 : i32
    %c0_i32_1 = arith.constant 0 : i32
    return %c0_i32, %c0_i32_0 : i32, i32
  }
  func.func @transform_3(%arg0: i32) -> (i32, i32) {
    %c0_i32 = arith.constant 0 : i32
    %c0_i32_0 = arith.constant 0 : i32
    %c0_i32_1 = arith.constant 0 : i32
    return %c0_i32, %c0_i32_0 : i32, i32
  }
  func.func @transform_4(%arg0: i32) -> (i32, i32) {
    %c0_i32 = arith.constant 0 : i32
    %c0_i32_0 = arith.constant 0 : i32
    %c0_i32_1 = arith.constant 0 : i32
    return %c0_i32, %c0_i32_0 : i32, i32
  }
  func.func @transform_5(%arg0: i32) -> (i32, i32) {
    %c0_i32 = arith.constant 0 : i32
    %c0_i32_0 = arith.constant 0 : i32
    %c0_i32_1 = arith.constant 0 : i32
    return %c0_i32, %c0_i32_0 : i32, i32
  }
  func.func @transform_6(%arg0: i32) -> (i32, i32) {
    %c0_i32 = arith.constant 0 : i32
    %c0_i32_0 = arith.constant 0 : i32
    %c0_i32_1 = arith.constant 0 : i32
    return %c0_i32, %c0_i32_0 : i32, i32
  }
  func.func @transform_7(%arg0: i32) -> (i32, i32) {
    %c0_i32 = arith.constant 0 : i32
    %c0_i32_0 = arith.constant 0 : i32
    return %c0_i32, %arg0 : i32, i32
  }
}

</mosaic_0001>

<llo_original>
// kernel: mvsnerf_forward.1
$region0: #{mvsnerf_forward.1}
  #allocation0 [shape = 'u32[]', space=smem, size = 0x4, offset = 0x4, fixed_abs, tag = 'smem constant byte address 0x4 - core index']
  #allocation1 [shape = 'u32[144,128]{1,0:T(1,128)}', space=vmem, size = 0x12000, scoped, tag = 'internal scratch']
  %s0 = inlined_call_operand.vmem [shape: f32[65,512], index: 0, kind: input, shape index: {}]
  %s1 = inlined_call_operand.vmem [shape: f32[64,65], index: 1, kind: input, shape index: {}]
  %s2 = inlined_call_operand.vmem [shape: f32[65,64], index: 2, kind: input, shape index: {}]
  %s3 = inlined_call_operand.vmem [shape: f32[3,64], index: 3, kind: input, shape index: {}]
  %s4 = inlined_call_operand.vmem [shape: f32[64,1], index: 4, kind: input, shape index: {}]
  %s5 = inlined_call_operand.vmem [shape: f32[65,1], index: 5, kind: input, shape index: {}]
  %s6 = inlined_call_operand.vmem [shape: f32[3,1], index: 6, kind: input, shape index: {}]
  %s7 = inlined_call_operand.vmem [shape: f32[4,512], index: 7, kind: output, shape index: {}]
  %s8 = sld [smem:[#allocation0]]
  $region84: #{mvsnerf_forward.1} parent=0
    _
  %s10 = ssub.s32 1, %s8
  %s11 = scalar_select 0, %s10, %s8
  $region1: #{mvsnerf_forward.1} parent=0
    #allocation2 [shape = 'u8[147456]{0}', space=vmem, size = 0x24000, scoped, tag = 'input window, operand 0']
    loop: start=0, step=1, limit=4
    $region2: #{mvsnerf_forward.1} parent=1 // loop_pre_header
      _
    $region3: #{mvsnerf_forward.1} parent=1 // loop_header
      %s13 = sphi 0, %s17
      %p14 = scmp.ge.s32.totalorder %s13, 4
      %s23 = sphi 0, %s25
      %s26 = sphi 0, %s23
      %s27 = sphi 0, %s26
      %s43 = sphi 0, %s27
      %s47 = sphi 0, %s47
      %s49 = sphi 0, %s47
      %s50 = sphi 0, %s49
      %s64 = sphi 0, %s50
      %s68 = sphi 0, %s68
      %s70 = sphi 0, %s68
      %s71 = sphi 0, %s70
      %s85 = sphi 0, %s71
      %s89 = sphi 0, %s89
      %s91 = sphi 0, %s89
      %s92 = sphi 0, %s91
      %s106 = sphi 0, %s92
      %s110 = sphi 0, %s110
      %s112 = sphi 0, %s110
      %s113 = sphi 0, %s112
      %s127 = sphi 0, %s113
      %s131 = sphi 0, %s131
      %s133 = sphi 0, %s131
      %s134 = sphi 0, %s133
      %s148 = sphi 0, %s134
      %s152 = sphi 0, %s152
      %s154 = sphi 0, %s152
      %s155 = sphi 0, %s154
      %s169 = sphi 0, %s155
      %s175 = sphi 0, %s177
      %s178 = sphi 0, %s175
      %s179 = sphi 0, %s178
      %s195 = sphi 0, %s179
    $region4: #{mvsnerf_forward.1} parent=1 // loop_header_branch
      %16 = sbr.rel (%p14) target = $region8
    $region5: #{mvsnerf_forward.1} parent=1 // loop_body
      %s18 = ssub.s32 %s13, 1
      %s19 = ssub.s32 %s13, 2
      %s20 = sadd.s32 %s13, 1
      %s21 = ssub.s32 %s13, %s20
      %p22 = scmp.eq.s32.totalorder %s21, 0
      %s24 = sadd.s32 %s23, 1
      %s25 = scalar_select %p22, %s23, %s24
      %p28 = pneg %p22
      %p29 = scmp.eq.s32.totalorder %s13, 1
      %p30 = por %p28, %p29
      %p31 = scmp.ne.s32.totalorder %s23, %s26
      %p32 = scmp.eq.s32.totalorder %s13, 0
      %p33 = por %p31, %p32
      %p34 = scmp.ne.s32.totalorder %s23, %s26
      %p35 = scmp.eq.s32.totalorder %s18, 1
      %p36 = por %p34, %p35
      %p37 = scmp.ne.s32.totalorder %s26, %s27
      %p38 = scmp.eq.s32.totalorder %s18, 0
      %p39 = por %p37, %p38
      %p40 = scmp.ne.s32.totalorder %s26, %s27
      %p41 = scmp.eq.s32.totalorder %s19, 1
      %p42 = por %p40, %p41
      %p44 = scmp.ne.s32.totalorder %s27, %s43
      %p45 = scmp.eq.s32.totalorder %s19, 0
      %p46 = por %p44, %p45
      %s48 = sadd.s32 %s47, 1
      %p51 = scmp.eq.s32.totalorder %s13, 1
      %p52 = scmp.ne.s32.totalorder %s47, %s49
      %p53 = scmp.eq.s32.totalorder %s13, 0
      %p54 = por %p52, %p53
      %p55 = scmp.ne.s32.totalorder %s47, %s49
      %p56 = scmp.eq.s32.totalorder %s18, 1
      %p57 = por %p55, %p56
      %p58 = scmp.ne.s32.totalorder %s49, %s50
      %p59 = scmp.eq.s32.totalorder %s18, 0
      %p60 = por %p58, %p59
      %p61 = scmp.ne.s32.totalorder %s49, %s50
      %p62 = scmp.eq.s32.totalorder %s19, 1
      %p63 = por %p61, %p62
      %p65 = scmp.ne.s32.totalorder %s50, %s64
      %p66 = scmp.eq.s32.totalorder %s19, 0
      %p67 = por %p65, %p66
      %s69 = sadd.s32 %s68, 1
      %p72 = scmp.eq.s32.totalorder %s13, 1
      %p73 = scmp.ne.s32.totalorder %s68, %s70
      %p74 = scmp.eq.s32.totalorder %s13, 0
      %p75 = por %p73, %p74
      %p76 = scmp.ne.s32.totalorder %s68, %s70
      %p77 = scmp.eq.s32.totalorder %s18, 1
      %p78 = por %p76, %p77
      %p79 = scmp.ne.s32.totalorder %s70, %s71
      %p80 = scmp.eq.s32.totalorder %s18, 0
      %p81 = por %p79, %p80
      %p82 = scmp.ne.s32.totalorder %s70, %s71
      %p83 = scmp.eq.s32.totalorder %s19, 1
      %p84 = por %p82, %p83
      %p86 = scmp.ne.s32.totalorder %s71, %s85
      %p87 = scmp.eq.s32.totalorder %s19, 0
      %p88 = por %p86, %p87
      %s90 = sadd.s32 %s89, 1
      %p93 = scmp.eq.s32.totalorder %s13, 1
      %p94 = scmp.ne.s32.totalorder %s89, %s91
      %p95 = scmp.eq.s32.totalorder %s13, 0
      %p96 = por %p94, %p95
      %p97 = scmp.ne.s32.totalorder %s89, %s91
      %p98 = scmp.eq.s32.totalorder %s18, 1
      %p99 = por %p97, %p98
      %p100 = scmp.ne.s32.totalorder %s91, %s92
      %p101 = scmp.eq.s32.totalorder %s18, 0
      %p102 = por %p100, %p101
      %p103 = scmp.ne.s32.totalorder %s91, %s92
      %p104 = scmp.eq.s32.totalorder %s19, 1
      %p105 = por %p103, %p104
      %p107 = scmp.ne.s32.totalorder %s92, %s106
      %p108 = scmp.eq.s32.totalorder %s19, 0
      %p109 = por %p107, %p108
      %s111 = sadd.s32 %s110, 1
      %p114 = scmp.eq.s32.totalorder %s13, 1
      %p115 = scmp.ne.s32.totalorder %s110, %s112
      %p116 = scmp.eq.s32.totalorder %s13, 0
      %p117 = por %p115, %p116
      %p118 = scmp.ne.s32.totalorder %s110, %s112
      %p119 = scmp.eq.s32.totalorder %s18, 1
      %p120 = por %p118, %p119
      %p121 = scmp.ne.s32.totalorder %s112, %s113
      %p122 = scmp.eq.s32.totalorder %s18, 0
      %p123 = por %p121, %p122
      %p124 = scmp.ne.s32.totalorder %s112, %s113
      %p125 = scmp.eq.s32.totalorder %s19, 1
      %p126 = por %p124, %p125
      %p128 = scmp.ne.s32.totalorder %s113, %s127
      %p129 = scmp.eq.s32.totalorder %s19, 0
      %p130 = por %p128, %p129
      %s132 = sadd.s32 %s131, 1
      %p135 = scmp.eq.s32.totalorder %s13, 1
      %p136 = scmp.ne.s32.totalorder %s131, %s133
      %p137 = scmp.eq.s32.totalorder %s13, 0
      %p138 = por %p136, %p137
      %p139 = scmp.ne.s32.totalorder %s131, %s133
      %p140 = scmp.eq.s32.totalorder %s18, 1
      %p141 = por %p139, %p140
      %p142 = scmp.ne.s32.totalorder %s133, %s134
      %p143 = scmp.eq.s32.totalorder %s18, 0
      %p144 = por %p142, %p143
      %p145 = scmp.ne.s32.totalorder %s133, %s134
      %p146 = scmp.eq.s32.totalorder %s19, 1
      %p147 = por %p145, %p146
      %p149 = scmp.ne.s32.totalorder %s134, %s148
      %p150 = scmp.eq.s32.totalorder %s19, 0
      %p151 = por %p149, %p150
      %s153 = sadd.s32 %s152, 1
      %p156 = scmp.eq.s32.totalorder %s13, 1
      %p157 = scmp.ne.s32.totalorder %s152, %s154
      %p158 = scmp.eq.s32.totalorder %s13, 0
      %p159 = por %p157, %p158
      %p160 = scmp.ne.s32.totalorder %s152, %s154
      %p161 = scmp.eq.s32.totalorder %s18, 1
      %p162 = por %p160, %p161
      %p163 = scmp.ne.s32.totalorder %s154, %s155
      %p164 = scmp.eq.s32.totalorder %s18, 0
      %p165 = por %p163, %p164
      %p166 = scmp.ne.s32.totalorder %s154, %s155
      %p167 = scmp.eq.s32.totalorder %s19, 1
      %p168 = por %p166, %p167
      %p170 = scmp.ne.s32.totalorder %s155, %s169
      %p171 = scmp.eq.s32.totalorder %s19, 0
      %p172 = por %p170, %p171
      %s173 = ssub.s32 %s13, %s20
      %p174 = scmp.eq.s32.totalorder %s173, 0
      %s176 = sadd.s32 %s175, 1
      %s177 = scalar_select %p174, %s175, %s176
      %p180 = pneg %p174
      %p181 = scmp.eq.s32.totalorder %s13, 1
      %p182 = por %p180, %p181
      %p183 = scmp.ne.s32.totalorder %s175, %s178
      %p184 = scmp.eq.s32.totalorder %s13, 0
      %p185 = por %p183, %p184
      %p186 = scmp.ne.s32.totalorder %s175, %s178
      %p187 = scmp.eq.s32.totalorder %s18, 1
      %p188 = por %p186, %p187
      %p189 = scmp.ne.s32.totalorder %s178, %s179
      %p190 = scmp.eq.s32.totalorder %s18, 0
      %p191 = por %p189, %p190
      %p192 = scmp.ne.s32.totalorder %s178, %s179
      %p193 = scmp.eq.s32.totalorder %s19, 1
      %p194 = por %p192, %p193
      %p196 = scmp.ne.s32.totalorder %s179, %s195
      %p197 = scmp.eq.s32.totalorder %s19, 0
      %p198 = por %p196, %p197
      %p199 = scmp.le.s32.totalorder 1, %s13
      %p200 = scmp.lt.s32.totalorder %s13, 3
      %p201 = pnand %p199, %p200
      %p202 = pneg %p201
      // Predicated region
      $region9: #{mvsnerf_forward.1} parent=5 // pred_check
        _
      $region10: #{mvsnerf_forward.1} parent=5 // pred_check_branch
        %204 = sbr.rel (%p201) target = $region12
      $region11: #{mvsnerf_forward.1} parent=5 // pred_region
        %s205 = ssub.s32 %s13, 1
        // Predicated region
        $region13: #{mvsnerf_forward.1} parent=11 // pred_check
          %p206 = pneg %p60
        $region14: #{mvsnerf_forward.1} parent=11 // pred_check_branch
          %208 = sbr.rel (%p206) target = $region16
        $region15: #{mvsnerf_forward.1} parent=11 // pred_region
          _
        $region16: #{mvsnerf_forward.1} parent=11 // pred_fallthru
          _
        // Predicated region
        $region17: #{mvsnerf_forward.1} parent=11 // pred_check
          %p209 = pneg %p81
        $region18: #{mvsnerf_forward.1} parent=11 // pred_check_branch
          %211 = sbr.rel (%p209) target = $region20
        $region19: #{mvsnerf_forward.1} parent=11 // pred_region
          _
        $region20: #{mvsnerf_forward.1} parent=11 // pred_fallthru
          _
        // Predicated region
        $region21: #{mvsnerf_forward.1} parent=11 // pred_check
          %p212 = pneg %p102
        $region22: #{mvsnerf_forward.1} parent=11 // pred_check_branch
          %214 = sbr.rel (%p212) target = $region24
        $region23: #{mvsnerf_forward.1} parent=11 // pred_region
          _
        $region24: #{mvsnerf_forward.1} parent=11 // pred_fallthru
          _
        // Predicated region
        $region25: #{mvsnerf_forward.1} parent=11 // pred_check
          %p215 = pneg %p123
        $region26: #{mvsnerf_forward.1} parent=11 // pred_check_branch
          %217 = sbr.rel (%p215) target = $region28
        $region27: #{mvsnerf_forward.1} parent=11 // pred_region
          _
        $region28: #{mvsnerf_forward.1} parent=11 // pred_fallthru
          _
        // Predicated region
        $region29: #{mvsnerf_forward.1} parent=11 // pred_check
          %p218 = pneg %p144
        $region30: #{mvsnerf_forward.1} parent=11 // pred_check_branch
          %220 = sbr.rel (%p218) target = $region32
        $region31: #{mvsnerf_forward.1} parent=11 // pred_region
          _
        $region32: #{mvsnerf_forward.1} parent=11 // pred_fallthru
          _
        // Predicated region
        $region33: #{mvsnerf_forward.1} parent=11 // pred_check
          %p221 = pneg %p165
        $region34: #{mvsnerf_forward.1} parent=11 // pred_check_branch
          %223 = sbr.rel (%p221) target = $region36
        $region35: #{mvsnerf_forward.1} parent=11 // pred_region
          _
        $region36: #{mvsnerf_forward.1} parent=11 // pred_fallthru
          _
      $region12: #{mvsnerf_forward.1} parent=5 // pred_fallthru
        _
      %p224 = scmp.lt.s32.totalorder %s13, 2
      // Predicated region
      $region37: #{mvsnerf_forward.1} parent=5 // pred_check
        %p225 = pneg %p224
      $region38: #{mvsnerf_forward.1} parent=5 // pred_check_branch
        %227 = sbr.rel (%p225) target = $region40
      $region39: #{mvsnerf_forward.1} parent=5 // pred_region
        // Predicated region
        $region41: #{mvsnerf_forward.1} parent=39 // pred_check
          %p228 = pneg %p33
        $region42: #{mvsnerf_forward.1} parent=39 // pred_check_branch
          %230 = sbr.rel (%p228) target = $region44
        $region43: #{mvsnerf_forward.1} parent=39 // pred_region
          %s231 = sand.u32 %s23, 1
          %s232 = sand.u32 %s23, 1
          %s233 = smul.addr %s232, 144
          %s234 = scalar_lea.vmem [#allocation2], %s233
          %s235 = smul.u32 2, %s13
          %s236 = smul.addr %s235, 8
          %s237 = scalar_lea.vmem %s0, %s236
          // Predicated region
          $region45: #{mvsnerf_forward.1} parent=43 // pred_check
            _
          $region46: #{mvsnerf_forward.1} parent=43 // pred_check_branch
            %239 = sbr.rel (0) target = $region48
          $region47: #{mvsnerf_forward.1} parent=43 // pred_region
            // Predicated region
            $region49: #{mvsnerf_forward.1} parent=47 // pred_check
              _
            $region50: #{mvsnerf_forward.1} parent=47 // pred_check_branch
              %241 = sbr.rel (0) target = $region52
            $region51: #{mvsnerf_forward.1} parent=47 // pred_region
              loop: start=0, step=1, limit=1
              $region53: #{mvsnerf_forward.1} parent=51 // loop_pre_header
                _
              $region54: #{mvsnerf_forward.1} parent=51 // loop_header
                %s243 = sphi 0, %s247
                %p244 = scmp.ge.s32.totalorder %s243, 1
                %s248 = sphi %s237, %s237
                %s249 = sphi %s234, %s234
              $region55: #{mvsnerf_forward.1} parent=51 // loop_header_branch
                %246 = sbr.rel (%p244) target = $region59
              $region56: #{mvsnerf_forward.1} parent=51 // loop_body
                %v250 = vld [vmem:[%s248] sm:$0xff]
                %251 = vst [vmem:[%s249] sm:$0xff] %v250
                %v252 = vld [vmem:[%s248 + $0x8] sm:$0xff]
                %253 = vst [vmem:[%s249 + $0x8] sm:$0xff] %v252
                %v254 = vld [vmem:[%s248 + $0x20] sm:$0xff]
                %255 = vst [vmem:[%s249 + $0x10] sm:$0xff] %v254
                %v256 = vld [vmem:[%s248 + $0x28] sm:$0xff]
                %257 = vst [vmem:[%s249 + $0x18] sm:$0xff] %v256
                %v258 = vld [vmem:[%s248 + $0x40] sm:$0xff]
                %259 = vst [vmem:[%s249 + $0x20] sm:$0xff] %v258
                %v260 = vld [vmem:[%s248 + $0x48] sm:$0xff]
                %261 = vst [vmem:[%s249 + $0x28] sm:$0xff] %v260
                %v262 = vld [vmem:[%s248 + $0x60] sm:$0xff]
                %263 = vst [vmem:[%s249 + $0x30] sm:$0xff] %v262
                %v264 = vld [vmem:[%s248 + $0x68] sm:$0xff]
                %265 = vst [vmem:[%s249 + $0x38] sm:$0xff] %v264
                %v266 = vld [vmem:[%s248 + $0x80] sm:$0xff]
                %267 = vst [vmem:[%s249 + $0x40] sm:$0xff] %v266
                %v268 = vld [vmem:[%s248 + $0x88] sm:$0xff]
                %269 = vst [vmem:[%s249 + $0x48] sm:$0xff] %v268
                %v270 = vld [vmem:[%s248 + $0xa0] sm:$0xff]
                %271 = vst [vmem:[%s249 + $0x50] sm:$0xff] %v270
                %v272 = vld [vmem:[%s248 + $0xa8] sm:$0xff]
                %273 = vst [vmem:[%s249 + $0x58] sm:$0xff] %v272
                %v274 = vld [vmem:[%s248 + $0xc0] sm:$0xff]
                %275 = vst [vmem:[%s249 + $0x60] sm:$0xff] %v274
                %v276 = vld [vmem:[%s248 + $0xc8] sm:$0xff]
                %277 = vst [vmem:[%s249 + $0x68] sm:$0xff] %v276
                %v278 = vld [vmem:[%s248 + $0xe0] sm:$0xff]
                %279 = vst [vmem:[%s249 + $0x70] sm:$0xff] %v278
                %v280 = vld [vmem:[%s248 + $0xe8] sm:$0xff]
                %281 = vst [vmem:[%s249 + $0x78] sm:$0xff] %v280
                %v282 = vld [vmem:[%s248 + $0x100] sm:$0xff]
                %283 = vst [vmem:[%s249 + $0x80] sm:$0xff] %v282
                %v284 = vld [vmem:[%s248 + $0x108] sm:$0xff]
                %285 = vst [vmem:[%s249 + $0x88] sm:$0xff] %v284
              $region57: #{mvsnerf_forward.1} parent=51 // loop_footer
                %s247 = sadd.s32 1, %s243
              $region58: #{mvsnerf_forward.1} parent=51 // loop_footer_branch
                %242 = sbr.rel target = $region54
              $region59: #{mvsnerf_forward.1} parent=51 // loop_exit
                _
            $region52: #{mvsnerf_forward.1} parent=47 // pred_fallthru
              _
            // Predicated region
            $region60: #{mvsnerf_forward.1} parent=47 // pred_check
              _
            $region61: #{mvsnerf_forward.1} parent=47 // pred_check_branch
              %287 = sbr.rel target = $region63
            $region62: #{mvsnerf_forward.1} parent=47 // pred_region
              _
            $region63: #{mvsnerf_forward.1} parent=47 // pred_fallthru
              _
          $region48: #{mvsnerf_forward.1} parent=43 // pred_fallthru
            _
          %288 = vnop
        $region44: #{mvsnerf_forward.1} parent=39 // pred_fallthru
          _
      $region40: #{mvsnerf_forward.1} parent=5 // pred_fallthru
        _
      %p289 = scmp.le.s32.totalorder 1, %s13
      %p290 = scmp.lt.s32.totalorder %s13, 3
      %p291 = pnand %p289, %p290
      %p292 = pneg %p291
      // Predicated region
      $region64: #{mvsnerf_forward.1} parent=5 // pred_check
        _
      $region65: #{mvsnerf_forward.1} parent=5 // pred_check_branch
        %294 = sbr.rel (%p291) target = $region67
      $region66: #{mvsnerf_forward.1} parent=5 // pred_region
        %s295 = ssub.s32 %s13, 1
        %s296 = sand.u32 %s26, 1
        %s297 = sand.u32 %s26, 1
        %s298 = smul.addr %s297, 144
        %s299 = scalar_lea.vmem [#allocation2], %s298
        // Predicated region
        $region68: #{mvsnerf_forward.1} parent=66 // pred_check
          %p300 = pneg %p39
        $region69: #{mvsnerf_forward.1} parent=66 // pred_check_branch
          %302 = sbr.rel (%p300) target = $region71
        $region70: #{mvsnerf_forward.1} parent=66 // pred_region
          _
        $region71: #{mvsnerf_forward.1} parent=66 // pred_fallthru
          _
        %s303 = sand.u32 %s26, 1
        %s304 = sand.u32 %s26, 1
        %s305 = smul.addr %s304, 144
        %s306 = scalar_lea.vmem [#allocation2], %s305
        %p307 = pneg %p39
        %p308 = pneg %p36
        %p309 = pneg %p60
        %p310 = pneg %p57
        %p311 = pneg %p81
        %p312 = pneg %p78
        %p313 = pneg %p102
        %p314 = pneg %p99
        %p315 = pneg %p123
        %p316 = pneg %p120
        %p317 = pneg %p144
        %p318 = pneg %p141
        %p319 = pneg %p165
        %p320 = pneg %p162
        %p321 = pneg %p191
        %p322 = pneg %p188
        %s323 = smul.u32 2, %s18
        %p324 = scmp.lt.s32.totalorder %s323, 3
        %s325 = scalar_select %p324, %s323, 3
        %s326 = smul.addr %s325, 4
        %s327 = scalar_lea.vmem %s7, %s326
        %s328 = smul.u32 2, %s18
        %s329 = smul.u32 2, %s18
        %p330 = scmp.lt.s32.totalorder %s329, 3
        %s331 = scalar_select %p330, %s329, 3
        %s332 = smul.addr %s331, 4
        %s333 = scalar_lea.vmem %s7, %s332
        %s334 = smul.u32 2, %s18
        %v335 = vld [vmem:[%s1] sm:$0xff]
        %v336 = vld [vmem:[%s1 + $0x8] sm:$0xff]
        %v337 = vld [vmem:[%s1 + $0x10] sm:$0xff]
        %v338 = vld [vmem:[%s1 + $0x18] sm:$0xff]
        %v339 = vld [vmem:[%s1 + $0x20] sm:$0xff]
        %v340 = vld [vmem:[%s1 + $0x28] sm:$0xff]
        %v341 = vld [vmem:[%s1 + $0x30] sm:$0xff]
        %v342 = vld [vmem:[%s1 + $0x38] sm:$0xff]
        %v343 = vld [vmem:[%s299] sm:$0xff]
        %v344 = vld [vmem:[%s299 + $0x8] sm:$0xff]
        %v345 = vld [vmem:[%s299 + $0x10] sm:$0xff]
        %v346 = vld [vmem:[%s299 + $0x18] sm:$0xff]
        %v347 = vld [vmem:[%s299 + $0x20] sm:$0xff]
        %v348 = vld [vmem:[%s299 + $0x28] sm:$0xff]
        %v349 = vld [vmem:[%s299 + $0x30] sm:$0xff]
        %v350 = vld [vmem:[%s299 + $0x38] sm:$0xff]
        %v351 = vld [vmem:[%s299 + $0x40] sm:$0xff]
        %v352 = vld [vmem:[%s299 + $0x48] sm:$0xff]
        %v353 = vld [vmem:[%s299 + $0x50] sm:$0xff]
        %v354 = vld [vmem:[%s299 + $0x58] sm:$0xff]
        %v355 = vld [vmem:[%s299 + $0x60] sm:$0xff]
        %v356 = vld [vmem:[%s299 + $0x68] sm:$0xff]
        %v357 = vld [vmem:[%s299 + $0x70] sm:$0xff]
        %v358 = vld [vmem:[%s299 + $0x78] sm:$0xff]
        %v359 = vld [vmem:[%s299 + $0x80] sm:$0x1]
        %v360 = vld [vmem:[%s299 + $0x88] sm:$0x1]
        %v361 = vld [vmem:[%s4] sm:$0xff]
        %v362 = vld [vmem:[%s4 + $0x8] sm:$0xff]
        %v363 = vld [vmem:[%s4 + $0x10] sm:$0xff]
        %v364 = vld [vmem:[%s4 + $0x18] sm:$0xff]
        %v365 = vld [vmem:[%s4 + $0x20] sm:$0xff]
        %v366 = vld [vmem:[%s4 + $0x28] sm:$0xff]
        %v367 = vld [vmem:[%s4 + $0x30] sm:$0xff]
        %v368 = vld [vmem:[%s4 + $0x38] sm:$0xff]
        %370 = vset.pattern.permute.xlu0 0
        %371 = vperm.xlu0 %370, %v361
        %v372 = vpop.permute.xlu0 %371
        %375 = vset.pattern.permute.xlu0 0
        %376 = vperm.xlu0 %375, %v362
        %v377 = vpop.permute.xlu0 %376
        %380 = vset.pattern.permute.xlu0 0
        %381 = vperm.xlu0 %380, %v363
        %v382 = vpop.permute.xlu0 %381
        %385 = vset.pattern.permute.xlu0 0
        %386 = vperm.xlu0 %385, %v364
        %v387 = vpop.permute.xlu0 %386
        %390 = vset.pattern.permute.xlu0 0
        %391 = vperm.xlu0 %390, %v365
        %v392 = vpop.permute.xlu0 %391
        %395 = vset.pattern.permute.xlu0 0
        %396 = vperm.xlu0 %395, %v366
        %v397 = vpop.permute.xlu0 %396
        %400 = vset.pattern.permute.xlu0 0
        %401 = vperm.xlu0 %400, %v367
        %v402 = vpop.permute.xlu0 %401
        %405 = vset.pattern.permute.xlu0 0
        %406 = vperm.xlu0 %405, %v368
        %v407 = vpop.permute.xlu0 %406
        %vm409 = vcmask 531456
        %v411 = vsel %vm409, %v335, 0
        %v414 = vsel %vm409, %v336, 0
        %v417 = vsel %vm409, %v337, 0
        %v420 = vsel %vm409, %v338, 0
        %v423 = vsel %vm409, %v339, 0
        %v426 = vsel %vm409, %v340, 0
        %v429 = vsel %vm409, %v341, 0
        %v432 = vsel %vm409, %v342, 0
        %vm434 = vcmask 1040384
        %v436 = vsel %vm434, %v359, 0
        %v439 = vsel %vm434, %v360, 0
        %441 = vmatprep.subr.mxu0 0.0
        %442 = vmatpush1.msra.mxu0 0.0
        %443 = vmatprep.subr.mxu0 0.0
        %444 = vmatpush1.msra.mxu0 0.0
        %445 = vmatprep.subr.mxu0 0.0
        %446 = vmatpush1.msra.mxu0 0.0
        %447 = vmatprep.subr.mxu0 0.0
        %448 = vmatpush1.msra.mxu0 0.0
        %449 = vmatprep.subr.mxu0 0.0
        %450 = vmatpush1.msra.mxu0 0.0
        %451 = vmatprep.subr.mxu0 0.0
        %452 = vmatpush1.msra.mxu0 0.0
        %453 = vmatprep.subr.mxu0 0.0
        %454 = vmatpush1.msra.mxu0 0.0
        %455 = vmatprep.subr.mxu0 %v439
        %456 = vmatpush1.msra.mxu0 %v436
        %457 = vmatprep.subr.mxu0 %v358
        %458 = vmatpush1.msra.mxu0 %v357
        %459 = vmatprep.subr.mxu0 %v356
        %460 = vmatpush1.msra.mxu0 %v355
        %461 = vmatprep.subr.mxu0 %v354
        %462 = vmatpush1.msra.mxu0 %v353
        %463 = vmatprep.subr.mxu0 %v352
        %464 = vmatpush1.msra.mxu0 %v351
        %465 = vmatprep.subr.mxu0 %v350
        %466 = vmatpush1.msra.mxu0 %v349
        %467 = vmatprep.subr.mxu0 %v348
        %468 = vmatpush1.msra.mxu0 %v347
        %469 = vmatprep.subr.mxu0 %v346
        %470 = vmatpush1.msra.mxu0 %v345
        %471 = vmatprep.subr.mxu0 %v344
        %472 = vmatpush1.msra.mxu0 %v343
        %473 = vmatprep.subr.mxu0 0.0
        %474 = vmatpush2.msra.mxu0 0.0
        %475 = vmatprep.subr.mxu0 0.0
        %476 = vmatpush2.msra.mxu0 0.0
        %477 = vmatprep.subr.mxu0 0.0
        %478 = vmatpush2.msra.mxu0 0.0
        %479 = vmatprep.subr.mxu0 0.0
        %480 = vmatpush2.msra.mxu0 0.0
        %481 = vmatprep.subr.mxu0 0.0
        %482 = vmatpush2.msra.mxu0 0.0
        %483 = vmatprep.subr.mxu0 0.0
        %484 = vmatpush2.msra.mxu0 0.0
        %485 = vmatprep.subr.mxu0 0.0
        %486 = vmatpush2.msra.mxu0 0.0
        %487 = vmatprep.subr.mxu0 0.0
        %488 = vmatpush2.msra.mxu0 0.0
        %489 = vmatprep.subr.mxu0 0.0
        %490 = vmatpush2.msra.mxu0 0.0
        %491 = vmatprep.subr.mxu0 0.0
        %492 = vmatpush2.msra.mxu0 0.0
        %493 = vmatprep.subr.mxu0 0.0
        %494 = vmatpush2.msra.mxu0 0.0
        %495 = vmatprep.subr.mxu0 0.0
        %496 = vmatpush2.msra.mxu0 0.0
        %497 = vmatprep.subr.mxu0 0.0
        %498 = vmatpush2.msra.mxu0 0.0
        %499 = vmatprep.subr.mxu0 0.0
        %500 = vmatpush2.msra.mxu0 0.0
        %501 = vmatprep.subr.mxu0 0.0
        %502 = vmatpush2.msra.mxu0 0.0
        %503 = vmatprep.subr.mxu0 0.0
        %504 = vmatpush2.msra.mxu0 0.0
        %505 = vmatprep.mubr.f32.mxu0 0.0
        %506 = vmatmul.mubr.f32.gmra.mxu0 %v411
        %v507 = vpop.f32.mrf.mxu0
        %v508 = vadd.f32 %v372, %v507
        %v509 = vpop.f32.mrf.mxu0
        %v510 = vadd.f32 %v372, %v509
        %511 = vmatprep.mubr.f32.mxu0 0.0
        %512 = vmatmul.mubr.f32.gmra.mxu0 %v414
        %v513 = vpop.f32.mrf.mxu0
        %v514 = vadd.f32 %v377, %v513
        %v515 = vpop.f32.mrf.mxu0
        %v516 = vadd.f32 %v377, %v515
        %517 = vmatprep.mubr.f32.mxu0 0.0
        %518 = vmatmul.mubr.f32.gmra.mxu0 %v417
        %v519 = vpop.f32.mrf.mxu0
        %v520 = vadd.f32 %v382, %v519
        %v521 = vpop.f32.mrf.mxu0
        %v522 = vadd.f32 %v382, %v521
        %523 = vmatprep.mubr.f32.mxu0 0.0
        %524 = vmatmul.mubr.f32.gmra.mxu0 %v420
        %v525 = vpop.f32.mrf.mxu0
        %v526 = vadd.f32 %v387, %v525
        %v527 = vpop.f32.mrf.mxu0
        %v528 = vadd.f32 %v387, %v527
        %529 = vmatprep.mubr.f32.mxu0 0.0
        %530 = vmatmul.mubr.f32.gmra.mxu0 %v423
        %v531 = vpop.f32.mrf.mxu0
        %v532 = vadd.f32 %v392, %v531
        %v533 = vpop.f32.mrf.mxu0
        %v534 = vadd.f32 %v392, %v533
        %535 = vmatprep.mubr.f32.mxu0 0.0
        %536 = vmatmul.mubr.f32.gmra.mxu0 %v426
        %v537 = vpop.f32.mrf.mxu0
        %v538 = vadd.f32 %v397, %v537
        %v539 = vpop.f32.mrf.mxu0
        %v540 = vadd.f32 %v397, %v539
        %541 = vmatprep.mubr.f32.mxu0 0.0
        %542 = vmatmul.mubr.f32.gmra.mxu0 %v429
        %v543 = vpop.f32.mrf.mxu0
        %v544 = vadd.f32 %v402, %v543
        %v545 = vpop.f32.mrf.mxu0
        %v546 = vadd.f32 %v402, %v545
        %547 = vmatprep.mubr.f32.mxu0 0.0
        %548 = vmatmul.mubr.f32.gmra.mxu0 %v432
        %v549 = vpop.f32.mrf.mxu0
        %v550 = vadd.f32 %v407, %v549
        %v551 = vpop.f32.mrf.mxu0
        %v552 = vadd.f32 %v407, %v551
        %553 = vdwg.mxu0
        %v554 = vmax.f32 %v508, 0.0
        %v555 = vmax.f32 %v510, 0.0
        %v556 = vmax.f32 %v514, 0.0
        %v557 = vmax.f32 %v516, 0.0
        %v558 = vmax.f32 %v520, 0.0
        %v559 = vmax.f32 %v522, 0.0
        %v560 = vmax.f32 %v526, 0.0
        %v561 = vmax.f32 %v528, 0.0
        %v562 = vmax.f32 %v532, 0.0
        %v563 = vmax.f32 %v534, 0.0
        %v564 = vmax.f32 %v538, 0.0
        %v565 = vmax.f32 %v540, 0.0
        %v566 = vmax.f32 %v544, 0.0
        %v567 = vmax.f32 %v546, 0.0
        %v568 = vmax.f32 %v550, 0.0
        %v569 = vmax.f32 %v552, 0.0
        %v570 = vld [vmem:[%s2] sm:$0xff]
        %v571 = vld [vmem:[%s2 + $0x8] sm:$0xff]
        %v572 = vld [vmem:[%s2 + $0x10] sm:$0xff]
        %v573 = vld [vmem:[%s2 + $0x18] sm:$0xff]
        %v574 = vld [vmem:[%s2 + $0x20] sm:$0xff]
        %v575 = vld [vmem:[%s2 + $0x28] sm:$0xff]
        %v576 = vld [vmem:[%s2 + $0x30] sm:$0xff]
        %v577 = vld [vmem:[%s2 + $0x38] sm:$0xff]
        %v578 = vld [vmem:[%s2 + $0x40] sm:$0x1]
        %v579 = vld [vmem:[%s5] sm:$0xff]
        %v580 = vld [vmem:[%s5 + $0x8] sm:$0xff]
        %v581 = vld [vmem:[%s5 + $0x10] sm:$0xff]
        %v582 = vld [vmem:[%s5 + $0x18] sm:$0xff]
        %v583 = vld [vmem:[%s5 + $0x20] sm:$0xff]
        %v584 = vld [vmem:[%s5 + $0x28] sm:$0xff]
        %v585 = vld [vmem:[%s5 + $0x30] sm:$0xff]
        %v586 = vld [vmem:[%s5 + $0x38] sm:$0xff]
        %v587 = vld [vmem:[%s5 + $0x40] sm:$0x1]
        %589 = vset.pattern.permute.xlu0 0
        %590 = vperm.xlu0 %589, %v579
        %v591 = vpop.permute.xlu0 %590
        %594 = vset.pattern.permute.xlu0 0
        %595 = vperm.xlu0 %594, %v580
        %v596 = vpop.permute.xlu0 %595
        %599 = vset.pattern.permute.xlu0 0
        %600 = vperm.xlu0 %599, %v581
        %v601 = vpop.permute.xlu0 %600
        %604 = vset.pattern.permute.xlu0 0
        %605 = vperm.xlu0 %604, %v582
        %v606 = vpop.permute.xlu0 %605
        %609 = vset.pattern.permute.xlu0 0
        %610 = vperm.xlu0 %609, %v583
        %v611 = vpop.permute.xlu0 %610
        %614 = vset.pattern.permute.xlu0 0
        %615 = vperm.xlu0 %614, %v584
        %v616 = vpop.permute.xlu0 %615
        %619 = vset.pattern.permute.xlu0 0
        %620 = vperm.xlu0 %619, %v585
        %v621 = vpop.permute.xlu0 %620
        %624 = vset.pattern.permute.xlu0 0
        %625 = vperm.xlu0 %624, %v586
        %v626 = vpop.permute.xlu0 %625
        %629 = vset.pattern.permute.xlu0 0
        %630 = vperm.xlu0 %629, %v587
        %v631 = vpop.permute.xlu0 %630
        %vm633 = vcmask 523264
        %v635 = vsel %vm633, %v570, 0
        %v638 = vsel %vm633, %v571, 0
        %v641 = vsel %vm633, %v572, 0
        %v644 = vsel %vm633, %v573, 0
        %v647 = vsel %vm633, %v574, 0
        %v650 = vsel %vm633, %v575, 0
        %v653 = vsel %vm633, %v576, 0
        %v656 = vsel %vm633, %v577, 0
        %v659 = vsel %vm633, %v578, 0
        %661 = vmatprep.subr.mxu0 0.0
        %662 = vmatpush1.msra.mxu0 0.0
        %663 = vmatprep.subr.mxu0 0.0
        %664 = vmatpush1.msra.mxu0 0.0
        %665 = vmatprep.subr.mxu0 0.0
        %666 = vmatpush1.msra.mxu0 0.0
        %667 = vmatprep.subr.mxu0 0.0
        %668 = vmatpush1.msra.mxu0 0.0
        %669 = vmatprep.subr.mxu0 0.0
        %670 = vmatpush1.msra.mxu0 0.0
        %671 = vmatprep.subr.mxu0 0.0
        %672 = vmatpush1.msra.mxu0 0.0
        %673 = vmatprep.subr.mxu0 0.0
        %674 = vmatpush1.msra.mxu0 0.0
        %675 = vmatprep.subr.mxu0 0.0
        %676 = vmatpush1.msra.mxu0 0.0
        %677 = vmatprep.subr.mxu0 %v569
        %678 = vmatpush1.msra.mxu0 %v568
        %679 = vmatprep.subr.mxu0 %v567
        %680 = vmatpush1.msra.mxu0 %v566
        %681 = vmatprep.subr.mxu0 %v565
        %682 = vmatpush1.msra.mxu0 %v564
        %683 = vmatprep.subr.mxu0 %v563
        %684 = vmatpush1.msra.mxu0 %v562
        %685 = vmatprep.subr.mxu0 %v561
        %686 = vmatpush1.msra.mxu0 %v560
        %687 = vmatprep.subr.mxu0 %v559
        %688 = vmatpush1.msra.mxu0 %v558
        %689 = vmatprep.subr.mxu0 %v557
        %690 = vmatpush1.msra.mxu0 %v556
        %691 = vmatprep.subr.mxu0 %v555
        %692 = vmatpush1.msra.mxu0 %v554
        %693 = vmatprep.subr.mxu0 0.0
        %694 = vmatpush2.msra.mxu0 0.0
        %695 = vmatprep.subr.mxu0 0.0
        %696 = vmatpush2.msra.mxu0 0.0
        %697 = vmatprep.subr.mxu0 0.0
        %698 = vmatpush2.msra.mxu0 0.0
        %699 = vmatprep.subr.mxu0 0.0
        %700 = vmatpush2.msra.mxu0 0.0
        %701 = vmatprep.subr.mxu0 0.0
        %702 = vmatpush2.msra.mxu0 0.0
        %703 = vmatprep.subr.mxu0 0.0
        %704 = vmatpush2.msra.mxu0 0.0
        %705 = vmatprep.subr.mxu0 0.0
        %706 = vmatpush2.msra.mxu0 0.0
        %707 = vmatprep.subr.mxu0 0.0
        %708 = vmatpush2.msra.mxu0 0.0
        %709 = vmatprep.subr.mxu0 0.0
        %710 = vmatpush2.msra.mxu0 0.0
        %711 = vmatprep.subr.mxu0 0.0
        %712 = vmatpush2.msra.mxu0 0.0
        %713 = vmatprep.subr.mxu0 0.0
        %714 = vmatpush2.msra.mxu0 0.0
        %715 = vmatprep.subr.mxu0 0.0
        %716 = vmatpush2.msra.mxu0 0.0
        %717 = vmatprep.subr.mxu0 0.0
        %718 = vmatpush2.msra.mxu0 0.0
        %719 = vmatprep.subr.mxu0 0.0
        %720 = vmatpush2.msra.mxu0 0.0
        %721 = vmatprep.subr.mxu0 0.0
        %722 = vmatpush2.msra.mxu0 0.0
        %723 = vmatprep.subr.mxu0 0.0
        %724 = vmatpush2.msra.mxu0 0.0
        %725 = vmatprep.mubr.f32.mxu0 0.0
        %726 = vmatmul.mubr.f32.gmra.mxu0 %v635
        %v727 = vpop.f32.mrf.mxu0
        %v728 = vadd.f32 %v591, %v727
        %v729 = vpop.f32.mrf.mxu0
        %v730 = vadd.f32 %v591, %v729
        %731 = vmatprep.mubr.f32.mxu0 0.0
        %732 = vmatmul.mubr.f32.gmra.mxu0 %v638
        %v733 = vpop.f32.mrf.mxu0
        %v734 = vadd.f32 %v596, %v733
        %v735 = vpop.f32.mrf.mxu0
        %v736 = vadd.f32 %v596, %v735
        %737 = vmatprep.mubr.f32.mxu0 0.0
        %738 = vmatmul.mubr.f32.gmra.mxu0 %v641
        %v739 = vpop.f32.mrf.mxu0
        %v740 = vadd.f32 %v601, %v739
        %v741 = vpop.f32.mrf.mxu0
        %v742 = vadd.f32 %v601, %v741
        %743 = vmatprep.mubr.f32.mxu0 0.0
        %744 = vmatmul.mubr.f32.gmra.mxu0 %v644
        %v745 = vpop.f32.mrf.mxu0
        %v746 = vadd.f32 %v606, %v745
        %v747 = vpop.f32.mrf.mxu0
        %v748 = vadd.f32 %v606, %v747
        %749 = vmatprep.mubr.f32.mxu0 0.0
        %750 = vmatmul.mubr.f32.gmra.mxu0 %v647
        %v751 = vpop.f32.mrf.mxu0
        %v752 = vadd.f32 %v611, %v751
        %v753 = vpop.f32.mrf.mxu0
        %v754 = vadd.f32 %v611, %v753
        %755 = vmatprep.mubr.f32.mxu0 0.0
        %756 = vmatmul.mubr.f32.gmra.mxu0 %v650
        %v757 = vpop.f32.mrf.mxu0
        %v758 = vadd.f32 %v616, %v757
        %v759 = vpop.f32.mrf.mxu0
        %v760 = vadd.f32 %v616, %v759
        %761 = vmatprep.mubr.f32.mxu0 0.0
        %762 = vmatmul.mubr.f32.gmra.mxu0 %v653
        %v763 = vpop.f32.mrf.mxu0
        %v764 = vadd.f32 %v621, %v763
        %v765 = vpop.f32.mrf.mxu0
        %v766 = vadd.f32 %v621, %v765
        %767 = vmatprep.mubr.f32.mxu0 0.0
        %768 = vmatmul.mubr.f32.gmra.mxu0 %v656
        %v769 = vpop.f32.mrf.mxu0
        %v770 = vadd.f32 %v626, %v769
        %v771 = vpop.f32.mrf.mxu0
        %v772 = vadd.f32 %v626, %v771
        %773 = vmatprep.mubr.f32.mxu0 0.0
        %774 = vmatmul.mubr.f32.gmra.mxu0 %v659
        %v775 = vpop.f32.mrf.mxu0
        %v776 = vadd.f32 %v631, %v775
        %v777 = vpop.f32.mrf.mxu0
        %v778 = vadd.f32 %v631, %v777
        %779 = vdwg.mxu0
        %vm780 = vcmp.gt.f32.partialorder %v776, 20.0
        %vm781 = vcmp.gt.f32.partialorder %v778, 20.0
        %v782 = vmin.f32 %v776, 20.0
        %v783 = vmin.f32 %v778, 20.0
        %v784 = vmul.f32 %v782, 1.442695
        %v785 = vpow.pop %v784
        %v786 = vmul.f32 %v783, 1.442695
        %v787 = vpow.pop %v786
        %v788 = vadd.f32 %v785, 1.0
        %v789 = vlog2.pop %v788
        %v790 = vmul.f32 %v789, 0.6931472
        %v791 = vmul.f32 -0.5, %v785
        %v792 = vadd.f32 %v791, 1.0
        %v793 = vmul.f32 %v792, %v785
        %v794 = vand.u32 2147483647, %v785
        %vm795 = vcmp.lt.f32.partialorder %v794, 0.0004427343
        %v796 = vsel %vm795, %v793, %v790
        %v797 = vadd.f32 %v787, 1.0
        %v798 = vlog2.pop %v797
        %v799 = vmul.f32 %v798, 0.6931472
        %v800 = vmul.f32 -0.5, %v787
        %v801 = vadd.f32 %v800, 1.0
        %v802 = vmul.f32 %v801, %v787
        %v803 = vand.u32 2147483647, %v787
        %vm804 = vcmp.lt.f32.partialorder %v803, 0.0004427343
        %v805 = vsel %vm804, %v802, %v799
        %v806 = vsel %vm780, %v776, %v796
        %v807 = vsel %vm781, %v778, %v805
        %v808 = vmax.f32 %v728, 0.0
        %v809 = vmax.f32 %v730, 0.0
        %v810 = vmax.f32 %v734, 0.0
        %v811 = vmax.f32 %v736, 0.0
        %v812 = vmax.f32 %v740, 0.0
        %v813 = vmax.f32 %v742, 0.0
        %v814 = vmax.f32 %v746, 0.0
        %v815 = vmax.f32 %v748, 0.0
        %v816 = vmax.f32 %v752, 0.0
        %v817 = vmax.f32 %v754, 0.0
        %v818 = vmax.f32 %v758, 0.0
        %v819 = vmax.f32 %v760, 0.0
        %v820 = vmax.f32 %v764, 0.0
        %v821 = vmax.f32 %v766, 0.0
        %v822 = vmax.f32 %v770, 0.0
        %v823 = vmax.f32 %v772, 0.0
        %v824 = vld [vmem:[%s3] sm:$0x7]
        %v825 = vld [vmem:[%s6] sm:$0x7]
        %827 = vset.pattern.permute.xlu0 0
        %828 = vperm.xlu0 %827, %v825
        %v829 = vpop.permute.xlu0 %828
        %v832 = vsel %vm633, %v824, 0
        %834 = vmatprep.subr.mxu0 0.0
        %835 = vmatpush1.msra.mxu0 0.0
        %836 = vmatprep.subr.mxu0 0.0
        %837 = vmatpush1.msra.mxu0 0.0
        %838 = vmatprep.subr.mxu0 0.0
        %839 = vmatpush1.msra.mxu0 0.0
        %840 = vmatprep.subr.mxu0 0.0
        %841 = vmatpush1.msra.mxu0 0.0
        %842 = vmatprep.subr.mxu0 0.0
        %843 = vmatpush1.msra.mxu0 0.0
        %844 = vmatprep.subr.mxu0 0.0
        %845 = vmatpush1.msra.mxu0 0.0
        %846 = vmatprep.subr.mxu0 0.0
        %847 = vmatpush1.msra.mxu0 0.0
        %848 = vmatprep.subr.mxu0 0.0
        %849 = vmatpush1.msra.mxu0 0.0
        %850 = vmatprep.subr.mxu0 %v823
        %851 = vmatpush1.msra.mxu0 %v822
        %852 = vmatprep.subr.mxu0 %v821
        %853 = vmatpush1.msra.mxu0 %v820
        %854 = vmatprep.subr.mxu0 %v819
        %855 = vmatpush1.msra.mxu0 %v818
        %856 = vmatprep.subr.mxu0 %v817
        %857 = vmatpush1.msra.mxu0 %v816
        %858 = vmatprep.subr.mxu0 %v815
        %859 = vmatpush1.msra.mxu0 %v814
        %860 = vmatprep.subr.mxu0 %v813
        %861 = vmatpush1.msra.mxu0 %v812
        %862 = vmatprep.subr.mxu0 %v811
        %863 = vmatpush1.msra.mxu0 %v810
        %864 = vmatprep.subr.mxu0 %v809
        %865 = vmatpush1.msra.mxu0 %v808
        %866 = vmatprep.subr.mxu0 0.0
        %867 = vmatpush2.msra.mxu0 0.0
        %868 = vmatprep.subr.mxu0 0.0
        %869 = vmatpush2.msra.mxu0 0.0
        %870 = vmatprep.subr.mxu0 0.0
        %871 = vmatpush2.msra.mxu0 0.0
        %872 = vmatprep.subr.mxu0 0.0
        %873 = vmatpush2.msra.mxu0 0.0
        %874 = vmatprep.subr.mxu0 0.0
        %875 = vmatpush2.msra.mxu0 0.0
        %876 = vmatprep.subr.mxu0 0.0
        %877 = vmatpush2.msra.mxu0 0.0
        %878 = vmatprep.subr.mxu0 0.0
        %879 = vmatpush2.msra.mxu0 0.0
        %880 = vmatprep.subr.mxu0 0.0
        %881 = vmatpush2.msra.mxu0 0.0
        %882 = vmatprep.subr.mxu0 0.0
        %883 = vmatpush2.msra.mxu0 0.0
        %884 = vmatprep.subr.mxu0 0.0
        %885 = vmatpush2.msra.mxu0 0.0
        %886 = vmatprep.subr.mxu0 0.0
        %887 = vmatpush2.msra.mxu0 0.0
        %888 = vmatprep.subr.mxu0 0.0
        %889 = vmatpush2.msra.mxu0 0.0
        %890 = vmatprep.subr.mxu0 0.0
        %891 = vmatpush2.msra.mxu0 0.0
        %892 = vmatprep.subr.mxu0 0.0
        %893 = vmatpush2.msra.mxu0 0.0
        %894 = vmatprep.subr.mxu0 0.0
        %895 = vmatpush2.msra.mxu0 0.0
        %896 = vmatprep.subr.mxu0 0.0
        %897 = vmatpush2.msra.mxu0 0.0
        %898 = vmatprep.mubr.f32.mxu0 0.0
        %899 = vmatmul.mubr.f32.gmra.mxu0 %v832
        %v900 = vpop.f32.mrf.mxu0
        %v901 = vadd.f32 %v829, %v900
        %v902 = vpop.f32.mrf.mxu0
        %v903 = vadd.f32 %v829, %v902
        %904 = vdwg.mxu0
        %v905 = vxor.u32 %v901, 2147483648
        %v906 = vxor.u32 %v903, 2147483648
        %v907 = vmul.f32 %v905, 1.442695
        %v908 = vpow.pop %v907
        %v909 = vmul.f32 %v906, 1.442695
        %v910 = vpow.pop %v909
        %v911 = vadd.f32 %v908, 1.0
        %v912 = vadd.f32 %v910, 1.0
        %v913 = vrcp.pop %v911
        %v914 = vmul.f32 1.0, %v913
        %v915 = vrcp.pop %v912
        %v916 = vmul.f32 1.0, %v915
        %v919 = vrot.slane %v806, 5
        %v920 = vrot.slane %v807, 5
        %vm923 = vcmask 1042432
        %v924 = vsel %vm923, %v914, %v919
        %v925 = vsel %vm923, %v916, %v920
        %v928 = vcombine.low %v924, %v925
        %930 = vst [vmem:[%s333] sm:$0xff] %v928
        %s931 = smul.u32 2, %s18
        %p932 = scmp.lt.s32.totalorder %s931, 3
        %s933 = scalar_select %p932, %s931, 3
        %s934 = smul.addr %s933, 4
        %s935 = scalar_lea.vmem %s7, %s934
        // Predicated region
        $region72: #{mvsnerf_forward.1} parent=66 // pred_check
          %p936 = pneg %p188
        $region73: #{mvsnerf_forward.1} parent=66 // pred_check_branch
          %938 = sbr.rel (%p936) target = $region75
        $region74: #{mvsnerf_forward.1} parent=66 // pred_region
          %s939 = smul.u32 2, %s18
        $region75: #{mvsnerf_forward.1} parent=66 // pred_fallthru
          _
      $region67: #{mvsnerf_forward.1} parent=5 // pred_fallthru
        _
      %p940 = scmp.le.s32.totalorder 2, %s13
      // Predicated region
      $region76: #{mvsnerf_forward.1} parent=5 // pred_check
        %p941 = pneg %p940
      $region77: #{mvsnerf_forward.1} parent=5 // pred_check_branch
        %943 = sbr.rel (%p941) target = $region79
      $region78: #{mvsnerf_forward.1} parent=5 // pred_region
        %s944 = ssub.s32 %s13, 2
        // Predicated region
        $region80: #{mvsnerf_forward.1} parent=78 // pred_check
          %p945 = pneg %p194
        $region81: #{mvsnerf_forward.1} parent=78 // pred_check_branch
          %947 = sbr.rel (%p945) target = $region83
        $region82: #{mvsnerf_forward.1} parent=78 // pred_region
          %s948 = smul.u32 2, %s19
          %p949 = scmp.lt.s32.totalorder %s948, 3
          %s950 = scalar_select %p949, %s948, 3
          %s951 = smul.addr %s950, 4
          %s952 = scalar_lea.vmem %s7, %s951
        $region83: #{mvsnerf_forward.1} parent=78 // pred_fallthru
          _
      $region79: #{mvsnerf_forward.1} parent=5 // pred_fallthru
        _
    $region6: #{mvsnerf_forward.1} parent=1 // loop_footer
      %s17 = sadd.s32 1, %s13
    $region7: #{mvsnerf_forward.1} parent=1 // loop_footer_branch
      %12 = sbr.rel target = $region3
    $region8: #{mvsnerf_forward.1} parent=1 // loop_exit
      _

</llo_original>
